<compile_context>
chip_gen: v7x
topology: tpu7x:2x2x1
jax: 0.10.0
libtpu: 0.0.40
codegen_flags: <defaults>
</compile_context>

<pallas_src>
import functools

import jax
import jax.numpy as jnp
from jax.experimental import pallas as pl
from jax.experimental.pallas import tpu as pltpu

LANES = 128
MAX_TILE_R = 2048      # (2048, 128) f32 = 1 MiB per pipeline buffer
NUM_SHARDS = 2         # leading 'parallel' grid axis (both TCs on v7x)


def _bce_sum_kernel(x_ref, t_ref, out_ref, acc_ref):
    """Per-shard accumulation of element-wise BCE-with-logits."""
    i = pl.program_id(1)  # reduction axis within this shard

    @pl.when(i == 0)
    def _():
        acc_ref[...] = jnp.zeros_like(acc_ref)

    x = x_ref[...].astype(jnp.float32)
    t = t_ref[...].astype(jnp.float32)
    # numerically stable BCE with logits: max(x, 0) - x*t + log1p(exp(-|x|))
    acc_ref[...] += jnp.maximum(x, 0.0) - x * t + jnp.log1p(jnp.exp(-jnp.abs(x)))

    @pl.when(i == pl.num_programs(1) - 1)
    def _():
        tile_r = acc_ref.shape[0]
        # fold the (tile_r,128) accumulator into a lane-dense (8,128) block;
        # sublane-group adds only (VPU), one-time epilogue per shard.
        out_ref[...] = acc_ref[...].reshape(tile_r // 8, 8, LANES).sum(axis=0)


def _bce_sum_pallas(x2, t2, tile_r, num_shards, steps):
    """Sum of BCE-with-logits over a (num_shards*steps*tile_r, 128) slab."""
    out = pl.pallas_call(
        _bce_sum_kernel,
        out_shape=jax.ShapeDtypeStruct((num_shards * 8, LANES), jnp.float32),
        grid_spec=pltpu.PrefetchScalarGridSpec(
            num_scalar_prefetch=0,
            grid=(num_shards, steps),
            in_specs=[
                pl.BlockSpec((tile_r, LANES), lambda c, i: (c * steps + i, 0)),
                pl.BlockSpec((tile_r, LANES), lambda c, i: (c * steps + i, 0)),
            ],
            out_specs=pl.BlockSpec((8, LANES), lambda c, i: (c, 0)),
            scratch_shapes=[pltpu.VMEM((tile_r, LANES), jnp.float32)],
        ),
        compiler_params=pltpu.CompilerParams(
            dimension_semantics=("parallel", "arbitrary"),
        ),
    )(x2, t2)
    return jnp.sum(out)


def _bce_tail_sum(x_tail, t_tail):
    """Plain-JAX sum for the (< one super-tile) unaligned tail."""
    if x_tail.shape[0] == 0:
        return jnp.float32(0.0)
    x = x_tail.astype(jnp.float32)
    t = t_tail.astype(jnp.float32)
    return jnp.sum(jnp.maximum(x, 0.0) - x * t + jnp.log1p(jnp.exp(-jnp.abs(x))))


@functools.partial(jax.jit, static_argnames=("alpha", "focal_alpha", "focal_gamma"))
def custom_loss(inputs, targets, alpha=0.25, focal_alpha=0.8, focal_gamma=2.0):
    n = inputs.size
    # keep original dtype: the kernel streams it and upcasts on-chip
    x = inputs.reshape(-1)
    t = targets.reshape(-1)

    rows = n // LANES
    if rows >= NUM_SHARDS * 8:
        tile_r = min(MAX_TILE_R, ((rows // NUM_SHARDS) // 8) * 8)
        steps = rows // (NUM_SHARDS * tile_r)
        kernel_rows = NUM_SHARDS * steps * tile_r
        kernel_n = kernel_rows * LANES
        x2 = x[:kernel_n].reshape(kernel_rows, LANES)
        t2 = t[:kernel_n].reshape(kernel_rows, LANES)
        bce_sum = _bce_sum_pallas(x2, t2, tile_r, NUM_SHARDS, steps)
        bce_sum = bce_sum + _bce_tail_sum(x[kernel_n:], t[kernel_n:])
    else:
        # tiny inputs: not worth a kernel launch
        bce_sum = _bce_tail_sum(x, t)

    bce_mean = bce_sum / jnp.float32(n)
    focal = focal_alpha * (1.0 - jnp.exp(-bce_mean)) ** focal_gamma * bce_mean
    return alpha * focal + (1.0 - alpha) * bce_mean


def _reference_loss(inputs, targets, alpha=0.25, focal_alpha=0.8, focal_gamma=2.0):
    x = inputs.astype(jnp.float32)
    t = targets.astype(jnp.float32)
    bce = jnp.maximum(x, 0.0) - x * t + jnp.log1p(jnp.exp(-jnp.abs(x)))
    b = jnp.mean(bce)
    focal = focal_alpha * (1.0 - jnp.exp(-b)) ** focal_gamma * b
    return alpha * focal + (1.0 - alpha) * b


if __name__ == "__main__":
    key = jax.random.PRNGKey(0)
    k1, k2 = jax.random.split(key)
    # NCHW, small: batch=2, channels=4, spatial=16
    inputs = jax.random.normal(k1, (2, 4, 16, 16), dtype=jnp.float32)  # logits
    targets = (jax.random.uniform(k2, (2, 4, 16, 16)) > 0.5).astype(jnp.float32)

    loss = custom_loss(inputs, targets)
    loss = jax.block_until_ready(loss)

    ref = _reference_loss(inputs, targets)
    assert jnp.allclose(loss, ref, rtol=1e-5, atol=1e-6), (loss, ref)

    print("KERNEL_OK")
</pallas_src>

<mosaic_0001>
module attributes {stable_mosaic.version = 11 : i64} {
  func.func @_bce_sum_kernel(%arg0: i32, %arg1: i32, %arg2: memref<8x128xf32, #tpu.memory_space<vmem>>, %arg3: memref<8x128xf32, #tpu.memory_space<vmem>>, %arg4: memref<8x128xf32, #tpu.memory_space<vmem>>, %arg5: memref<8x128xf32, #tpu.memory_space<vmem>>) attributes {dimension_semantics = [#tpu.dimension_semantics<parallel>, #tpu.dimension_semantics<arbitrary>], iteration_bounds = array<i64: 2, 1>, scalar_prefetch = 0 : i64, scratch_operands = 1 : i64, tpu.core_type = #tpu.core_type<tc>, window_params = [{transform_indices = @transform_0, window_bounds = array<i64: 8, 128>}, {transform_indices = @transform_1, window_bounds = array<i64: 8, 128>}, {transform_indices = @transform_2, window_bounds = array<i64: 8, 128>}]} {
    %c0_i32 = arith.constant 0 : i32
    %0 = arith.cmpi eq, %arg1, %c0_i32 : i32
    %1 = arith.extui %0 : i1 to i32
    %c0_i32_0 = arith.constant 0 : i32
    %2 = arith.cmpi ne, %1, %c0_i32_0 : i32
    scf.if %2 {
      %cst_11 = arith.constant 0.000000e+00 : f32
      %21 = vector.broadcast %cst_11 : f32 to vector<8x128xf32>
      %c0_12 = arith.constant 0 : index
      %c0_13 = arith.constant 0 : index
      %22 = vector.load %arg5[%c0_12, %c0_13] : memref<8x128xf32, #tpu.memory_space<vmem>>, vector<8x128xf32>
      tpu.vector_store %arg5[%c0_12, %c0_13], %21 {strides = array<i32>} : memref<8x128xf32, #tpu.memory_space<vmem>>, vector<8x128xf32>,
    } else {
    }
    %c0 = arith.constant 0 : index
    %c0_1 = arith.constant 0 : index
    %3 = vector.load %arg2[%c0, %c0_1] : memref<8x128xf32, #tpu.memory_space<vmem>>, vector<8x128xf32>
    %c0_2 = arith.constant 0 : index
    %c0_3 = arith.constant 0 : index
    %4 = vector.load %arg3[%c0_2, %c0_3] : memref<8x128xf32, #tpu.memory_space<vmem>>, vector<8x128xf32>
    %c0_4 = arith.constant 0 : index
    %c0_5 = arith.constant 0 : index
    %5 = vector.load %arg5[%c0_4, %c0_5] : memref<8x128xf32, #tpu.memory_space<vmem>>, vector<8x128xf32>
    %cst = arith.constant 0.000000e+00 : f32
    %6 = vector.broadcast %cst : f32 to vector<8x128xf32>
    %7 = arith.maximumf %3, %6 : vector<8x128xf32>
    %8 = arith.mulf %3, %4 : vector<8x128xf32>
    %9 = arith.subf %7, %8 : vector<8x128xf32>
    %10 = math.absf %3 : vector<8x128xf32>
    %cst_6 = arith.constant 0.000000e+00 : f32
    %11 = vector.broadcast %cst_6 : f32 to vector<8x128xf32>
    %12 = arith.subf %11, %10 : vector<8x128xf32>
    %13 = math.exp %12 : vector<8x128xf32>
    %14 = math.log1p %13 : vector<8x128xf32>
    %15 = arith.addf %9, %14 : vector<8x128xf32>
    %16 = arith.addf %5, %15 : vector<8x128xf32>
    %c0_7 = arith.constant 0 : index
    %c0_8 = arith.constant 0 : index
    %17 = vector.load %arg5[%c0_7, %c0_8] : memref<8x128xf32, #tpu.memory_space<vmem>>, vector<8x128xf32>
    tpu.vector_store %arg5[%c0_7, %c0_8], %16 {strides = array<i32>} : memref<8x128xf32, #tpu.memory_space<vmem>>, vector<8x128xf32>,
    %c0_i32_9 = arith.constant 0 : i32
    %18 = arith.cmpi eq, %arg1, %c0_i32_9 : i32
    %19 = arith.extui %18 : i1 to i32
    %c0_i32_10 = arith.constant 0 : i32
    %20 = arith.cmpi ne, %19, %c0_i32_10 : i32
    scf.if %20 {
      %c0_11 = arith.constant 0 : index
      %c0_12 = arith.constant 0 : index
      %21 = vector.load %arg5[%c0_11, %c0_12] : memref<8x128xf32, #tpu.memory_space<vmem>>, vector<8x128xf32>
      %22 = vector.shape_cast %21 : vector<8x128xf32> to vector<1x8x128xf32>
      %cst_13 = arith.constant dense<0.000000e+00> : vector<8x128xf32>
      %23 = vector.multi_reduction <add>, %22, %cst_13 [0] : vector<1x8x128xf32> to vector<8x128xf32>
      %c0_14 = arith.constant 0 : index
      %c0_15 = arith.constant 0 : index
      %24 = vector.load %arg4[%c0_14, %c0_15] : memref<8x128xf32, #tpu.memory_space<vmem>>, vector<8x128xf32>
      tpu.vector_store %arg4[%c0_14, %c0_15], %23 {strides = array<i32>} : memref<8x128xf32, #tpu.memory_space<vmem>>, vector<8x128xf32>,
    } else {
    }
    return
  }
  func.func @transform_0(%arg0: i32, %arg1: i32) -> (i32, i32) {
    %c1_i32 = arith.constant 1 : i32
    %0 = arith.muli %arg0, %c1_i32 : i32
    %1 = arith.addi %0, %arg1 : i32
    %c0_i32 = arith.constant 0 : i32
    %c0_i32_0 = arith.constant 0 : i32
    return %1, %c0_i32 : i32, i32
  }
  func.func @transform_1(%arg0: i32, %arg1: i32) -> (i32, i32) {
    %c1_i32 = arith.constant 1 : i32
    %0 = arith.muli %arg0, %c1_i32 : i32
    %1 = arith.addi %0, %arg1 : i32
    %c0_i32 = arith.constant 0 : i32
    %c0_i32_0 = arith.constant 0 : i32
    return %1, %c0_i32 : i32, i32
  }
  func.func @transform_2(%arg0: i32, %arg1: i32) -> (i32, i32) {
    %c0_i32 = arith.constant 0 : i32
    %c0_i32_0 = arith.constant 0 : i32
    return %arg0, %c0_i32 : i32, i32
  }
}

</mosaic_0001>

<llo_original>
// kernel: custom_loss.1
$region0: #{custom_loss.1}
  #allocation0 [shape = 'u32[]', space=smem, size = 0x4, offset = 0x4, fixed_abs, tag = 'smem constant byte address 0x4 - core index']
  #allocation1 [shape = 'u32[144,128]{1,0:T(1,128)}', space=vmem, size = 0x12000, scoped, tag = 'internal scratch']
  #allocation2 [shape = 'f32[8,128]{1,0:T(8,128)}', space=vmem, size = 0x1000, scoped, tag = 'scratch operand']
  %s0 = inlined_call_operand.vmem [shape: f32[16,128], index: 0, kind: input, shape index: {}]
  %s1 = inlined_call_operand.vmem [shape: f32[16,128], index: 1, kind: input, shape index: {}]
  %s2 = inlined_call_operand.vmem [shape: f32[16,128], index: 2, kind: output, shape index: {}]
  %s3 = sld [smem:[#allocation0]]
  $region49: #{custom_loss.1} parent=0
    _
  %s5 = ssub.s32 1, %s3
  %s6 = scalar_select 0, %s5, %s3
  loop: start=0, step=1, limit=4
  $region2: #{custom_loss.1} parent=0 // loop_pre_header
    _
  $region3: #{custom_loss.1} parent=0 // loop_header
    %s8 = sphi 0, %s12
    %p9 = scmp.ge.s32.totalorder %s8, 4
    %s15 = sphi 0, %s27
    %s16 = sphi 0, %s23
    %s17 = sphi 0, %s15
    %s18 = sphi 0, %s16
    %s19 = sphi 0, %s17
    %s20 = sphi 0, %s18
    %s32 = sphi 0, %s34
    %s35 = sphi 0, %s32
    %s36 = sphi 0, %s35
    %s52 = sphi 0, %s36
    %s60 = sphi 0, %s62
    %s63 = sphi 0, %s60
    %s64 = sphi 0, %s63
    %s80 = sphi 0, %s64
    %s86 = sphi 0, %s88
    %s89 = sphi 0, %s86
    %s90 = sphi 0, %s89
    %s106 = sphi 0, %s90
  $region4: #{custom_loss.1} parent=0 // loop_header_branch
    %11 = sbr.rel (%p9) target = $region8
  $region5: #{custom_loss.1} parent=0 // loop_body
    %s13 = ssub.s32 %s8, 1
    %s14 = ssub.s32 %s8, 2
    %s21 = sadd.s32 1, %s16
    %p22 = scmp.ge.s32.totalorder %s21, 1
    %s23 = scalar_select %p22, 0, %s21
    %s24 = sadd.s32 1, %s15
    %s25 = scalar_select %p22, %s24, %s15
    %p26 = scmp.ge.s32.totalorder %s25, 2
    %s27 = scalar_select %p26, 0, %s25
    %s28 = sadd.s32 %s15, %s16
    %s29 = sadd.s32 %s27, %s23
    %s30 = ssub.s32 %s28, %s29
    %p31 = scmp.eq.s32.totalorder %s30, 0
    %s33 = sadd.s32 %s32, 1
    %s34 = scalar_select %p31, %s32, %s33
    %p37 = pneg %p31
    %p38 = scmp.eq.s32.totalorder %s8, 1
    %p39 = por %p37, %p38
    %p40 = scmp.ne.s32.totalorder %s32, %s35
    %p41 = scmp.eq.s32.totalorder %s8, 0
    %p42 = por %p40, %p41
    %p43 = scmp.ne.s32.totalorder %s32, %s35
    %p44 = scmp.eq.s32.totalorder %s13, 1
    %p45 = por %p43, %p44
    %p46 = scmp.ne.s32.totalorder %s35, %s36
    %p47 = scmp.eq.s32.totalorder %s13, 0
    %p48 = por %p46, %p47
    %p49 = scmp.ne.s32.totalorder %s35, %s36
    %p50 = scmp.eq.s32.totalorder %s14, 1
    %p51 = por %p49, %p50
    %p53 = scmp.ne.s32.totalorder %s36, %s52
    %p54 = scmp.eq.s32.totalorder %s14, 0
    %p55 = por %p53, %p54
    %s56 = sadd.s32 %s15, %s16
    %s57 = sadd.s32 %s27, %s23
    %s58 = ssub.s32 %s56, %s57
    %p59 = scmp.eq.s32.totalorder %s58, 0
    %s61 = sadd.s32 %s60, 1
    %s62 = scalar_select %p59, %s60, %s61
    %p65 = pneg %p59
    %p66 = scmp.eq.s32.totalorder %s8, 1
    %p67 = por %p65, %p66
    %p68 = scmp.ne.s32.totalorder %s60, %s63
    %p69 = scmp.eq.s32.totalorder %s8, 0
    %p70 = por %p68, %p69
    %p71 = scmp.ne.s32.totalorder %s60, %s63
    %p72 = scmp.eq.s32.totalorder %s13, 1
    %p73 = por %p71, %p72
    %p74 = scmp.ne.s32.totalorder %s63, %s64
    %p75 = scmp.eq.s32.totalorder %s13, 0
    %p76 = por %p74, %p75
    %p77 = scmp.ne.s32.totalorder %s63, %s64
    %p78 = scmp.eq.s32.totalorder %s14, 1
    %p79 = por %p77, %p78
    %p81 = scmp.ne.s32.totalorder %s64, %s80
    %p82 = scmp.eq.s32.totalorder %s14, 0
    %p83 = por %p81, %p82
    %s84 = ssub.s32 %s15, %s27
    %p85 = scmp.eq.s32.totalorder %s84, 0
    %s87 = sadd.s32 %s86, 1
    %s88 = scalar_select %p85, %s86, %s87
    %p91 = pneg %p85
    %p92 = scmp.eq.s32.totalorder %s8, 1
    %p93 = por %p91, %p92
    %p94 = scmp.ne.s32.totalorder %s86, %s89
    %p95 = scmp.eq.s32.totalorder %s8, 0
    %p96 = por %p94, %p95
    %p97 = scmp.ne.s32.totalorder %s86, %s89
    %p98 = scmp.eq.s32.totalorder %s13, 1
    %p99 = por %p97, %p98
    %p100 = scmp.ne.s32.totalorder %s89, %s90
    %p101 = scmp.eq.s32.totalorder %s13, 0
    %p102 = por %p100, %p101
    %p103 = scmp.ne.s32.totalorder %s89, %s90
    %p104 = scmp.eq.s32.totalorder %s14, 1
    %p105 = por %p103, %p104
    %p107 = scmp.ne.s32.totalorder %s90, %s106
    %p108 = scmp.eq.s32.totalorder %s14, 0
    %p109 = por %p107, %p108
    %p110 = scmp.le.s32.totalorder 1, %s8
    %p111 = scmp.lt.s32.totalorder %s8, 3
    %p112 = pnand %p110, %p111
    %p113 = pneg %p112
    // Predicated region
    $region9: #{custom_loss.1} parent=5 // pred_check
      _
    $region10: #{custom_loss.1} parent=5 // pred_check_branch
      %115 = sbr.rel (%p112) target = $region12
    $region11: #{custom_loss.1} parent=5 // pred_region
      %s116 = ssub.s32 %s8, 1
    $region12: #{custom_loss.1} parent=5 // pred_fallthru
      _
    %p117 = scmp.lt.s32.totalorder %s8, 2
    // Predicated region
    $region13: #{custom_loss.1} parent=5 // pred_check
      %p118 = pneg %p117
    $region14: #{custom_loss.1} parent=5 // pred_check_branch
      %120 = sbr.rel (%p118) target = $region16
    $region15: #{custom_loss.1} parent=5 // pred_region
      // Predicated region
      $region17: #{custom_loss.1} parent=15 // pred_check
        %p121 = pneg %p42
      $region18: #{custom_loss.1} parent=15 // pred_check_branch
        %123 = sbr.rel (%p121) target = $region20
      $region19: #{custom_loss.1} parent=15 // pred_region
        %s124 = sadd.s32 %s15, %s16
        %p125 = scmp.lt.s32.totalorder %s124, 1
        %s126 = scalar_select %p125, %s124, 1
        %s127 = smul.addr %s126, 8
        %s128 = scalar_lea.vmem %s0, %s127
        %s129 = sadd.s32 %s15, %s16
      $region20: #{custom_loss.1} parent=15 // pred_fallthru
        _
      // Predicated region
      $region21: #{custom_loss.1} parent=15 // pred_check
        %p130 = pneg %p70
      $region22: #{custom_loss.1} parent=15 // pred_check_branch
        %132 = sbr.rel (%p130) target = $region24
      $region23: #{custom_loss.1} parent=15 // pred_region
        %s133 = sadd.s32 %s15, %s16
        %p134 = scmp.lt.s32.totalorder %s133, 1
        %s135 = scalar_select %p134, %s133, 1
        %s136 = smul.addr %s135, 8
        %s137 = scalar_lea.vmem %s1, %s136
        %s138 = sadd.s32 %s15, %s16
      $region24: #{custom_loss.1} parent=15 // pred_fallthru
        _
    $region16: #{custom_loss.1} parent=5 // pred_fallthru
      _
    %p139 = scmp.le.s32.totalorder 1, %s8
    %p140 = scmp.lt.s32.totalorder %s8, 3
    %p141 = pnand %p139, %p140
    %p142 = pneg %p141
    // Predicated region
    $region25: #{custom_loss.1} parent=5 // pred_check
      _
    $region26: #{custom_loss.1} parent=5 // pred_check_branch
      %144 = sbr.rel (%p141) target = $region28
    $region27: #{custom_loss.1} parent=5 // pred_region
      %s145 = ssub.s32 %s8, 1
      %s146 = sadd.s32 %s17, %s18
      %p147 = scmp.lt.s32.totalorder %s146, 1
      %s148 = scalar_select %p147, %s146, 1
      %s149 = smul.addr %s148, 8
      %s150 = scalar_lea.vmem %s0, %s149
      %p151 = pneg %p48
      %p152 = pneg %p45
      %s153 = sadd.s32 %s17, %s18
      %p154 = scmp.lt.s32.totalorder %s153, 1
      %s155 = scalar_select %p154, %s153, 1
      %s156 = smul.addr %s155, 8
      %s157 = scalar_lea.vmem %s1, %s156
      %p158 = pneg %p76
      %p159 = pneg %p73
      %p160 = pneg %p102
      %p161 = pneg %p99
      %p162 = scmp.lt.s32.totalorder %s17, 1
      %s163 = scalar_select %p162, %s17, 1
      %s164 = smul.addr %s163, 8
      %s165 = scalar_lea.vmem %s2, %s164
      %s166 = sadd.s32 %s17, %s18
      %p167 = scmp.lt.s32.totalorder %s166, 1
      %s168 = scalar_select %p167, %s166, 1
      %s169 = smul.addr %s168, 8
      %s170 = scalar_lea.vmem %s0, %s169
      %s171 = sadd.s32 %s17, %s18
      %s172 = sadd.s32 %s17, %s18
      %p173 = scmp.lt.s32.totalorder %s172, 1
      %s174 = scalar_select %p173, %s172, 1
      %s175 = smul.addr %s174, 8
      %s176 = scalar_lea.vmem %s1, %s175
      %s177 = sadd.s32 %s17, %s18
      %p178 = scmp.lt.s32.totalorder %s17, 1
      %s179 = scalar_select %p178, %s17, 1
      %s180 = smul.addr %s179, 8
      %s181 = scalar_lea.vmem %s2, %s180
      %p182 = scmp.eq.s32.totalorder %s18, 0
      // Predicated region
      $region29: #{custom_loss.1} parent=27 // pred_check
        %p183 = pneg %p182
      $region30: #{custom_loss.1} parent=27 // pred_check_branch
        %185 = sbr.rel (%p183) target = $region32
      $region31: #{custom_loss.1} parent=27 // pred_region
        %186 = vst [vmem:[#allocation2] sm:$0xff] 0.0
      $region32: #{custom_loss.1} parent=27 // pred_fallthru
        _
      %v187 = vld [vmem:[%s170] sm:$0xff]
      %v188 = vld [vmem:[%s176] sm:$0xff]
      %v189 = vld [vmem:[#allocation2] sm:$0xff]
      %v190 = vmax.f32 %v187, 0.0
      %v191 = vmul.f32 %v187, %v188
      %v192 = vsub.f32 %v190, %v191
      %v193 = vand.u32 2147483647, %v187
      %v194 = vsub.f32 0.0, %v193
      %v195 = vmul.f32 %v194, 1.442695
      %v196 = vpow.pop %v195
      %v197 = vadd.f32 %v196, 1.0
      %v198 = vlog2.pop %v197
      %v199 = vmul.f32 %v198, 0.6931472
      %v200 = vmul.f32 -0.5, %v196
      %v201 = vadd.f32 %v200, 1.0
      %v202 = vmul.f32 %v201, %v196
      %v203 = vand.u32 2147483647, %v196
      %vm204 = vcmp.lt.f32.partialorder %v203, 0.0004427343
      %v205 = vsel %vm204, %v202, %v199
      %v206 = vadd.f32 %v192, %v205
      %v207 = vadd.f32 %v189, %v206
      %208 = vst [vmem:[#allocation2] sm:$0xff] %v207
      // Predicated region
      $region33: #{custom_loss.1} parent=27 // pred_check
        %p209 = pneg %p182
      $region34: #{custom_loss.1} parent=27 // pred_check_branch
        %211 = sbr.rel (%p209) target = $region36
      $region35: #{custom_loss.1} parent=27 // pred_region
        %v212 = vld [vmem:[#allocation2] sm:$0xff]
        %v213 = vadd.f32 %v212, 0.0
        %214 = vst [vmem:[%s181] sm:$0xff] %v213
      $region36: #{custom_loss.1} parent=27 // pred_fallthru
        _
      %p215 = scmp.lt.s32.totalorder %s17, 1
      %s216 = scalar_select %p215, %s17, 1
      %s217 = smul.addr %s216, 8
      %s218 = scalar_lea.vmem %s2, %s217
      // Predicated region
      $region37: #{custom_loss.1} parent=27 // pred_check
        %p219 = pneg %p99
      $region38: #{custom_loss.1} parent=27 // pred_check_branch
        %221 = sbr.rel (%p219) target = $region40
      $region39: #{custom_loss.1} parent=27 // pred_region
        _
      $region40: #{custom_loss.1} parent=27 // pred_fallthru
        _
    $region28: #{custom_loss.1} parent=5 // pred_fallthru
      _
    %p222 = scmp.le.s32.totalorder 2, %s8
    // Predicated region
    $region41: #{custom_loss.1} parent=5 // pred_check
      %p223 = pneg %p222
    $region42: #{custom_loss.1} parent=5 // pred_check_branch
      %225 = sbr.rel (%p223) target = $region44
    $region43: #{custom_loss.1} parent=5 // pred_region
      %s226 = ssub.s32 %s8, 2
      // Predicated region
      $region45: #{custom_loss.1} parent=43 // pred_check
        %p227 = pneg %p105
      $region46: #{custom_loss.1} parent=43 // pred_check_branch
        %229 = sbr.rel (%p227) target = $region48
      $region47: #{custom_loss.1} parent=43 // pred_region
        %p230 = scmp.lt.s32.totalorder %s19, 1
        %s231 = scalar_select %p230, %s19, 1
        %s232 = smul.addr %s231, 8
        %s233 = scalar_lea.vmem %s2, %s232
      $region48: #{custom_loss.1} parent=43 // pred_fallthru
        _
    $region44: #{custom_loss.1} parent=5 // pred_fallthru
      _
  $region6: #{custom_loss.1} parent=0 // loop_footer
    %s12 = sadd.s32 1, %s8
  $region7: #{custom_loss.1} parent=0 // loop_footer_branch
    %7 = sbr.rel target = $region3
  $region8: #{custom_loss.1} parent=0 // loop_exit
    _

</llo_original>
